<compile_context>
chip_gen: v7x
topology: tpu7x:2x2x1
jax: 0.10.0
libtpu: 0.0.40
codegen_flags: <defaults>
</compile_context>

<pallas_src>
import jax
import jax.numpy as jnp
from jax.experimental import pallas as pl
from jax.experimental.pallas import tpu as pltpu

IN_DIM = 784
HID_DIM = 128
OUT_DIM = 10

IN_PAD = 896      # 7 * 128 : lane-aligned contraction dim
OUT_PAD = 128     # lane-dense output slab (cols 10..127 are zero)


def _round_up(n: int, m: int) -> int:
    return ((n + m - 1) // m) * m


def bobnet_kernel(x_ref, w1_ref, w2_ref, o_ref):
    # First matmul on the MXU: bf16 x bf16 -> f32 accumulation.
    h = jnp.dot(x_ref[...], w1_ref[...], preferred_element_type=jnp.float32)
    # ReLU on the VPU, kept in f32 (hidden activation never touches HBM).
    h = jnp.maximum(h, 0.0)
    # Second matmul (128 -> 128 lane-dense slab), f32.
    o = jnp.dot(h, w2_ref[...], preferred_element_type=jnp.float32)
    o_ref[...] = o.astype(o_ref.dtype)


def bobnet_forward(x, w1, w2, *, tm=256):
    """Forward pass matching the PyTorch module.

    x : (B, 784) f32
    w1: (128, 784) f32   -- nn.Linear(784, 128) weight, PyTorch (out, in) layout
    w2: (10, 128)  f32   -- nn.Linear(128, 10)  weight, PyTorch (out, in) layout
    returns (B, 10) f32
    """
    B = x.shape[0]

    # ---- weight prep (could be done offline, once) -------------------------
    # transpose to (in, out), zero-pad K to 896, narrow the big weight to bf16.
    w1_t = jnp.zeros((IN_PAD, HID_DIM), jnp.bfloat16)
    w1_t = w1_t.at[:IN_DIM, :].set(w1.T.astype(jnp.bfloat16))
    # small weight: zero-pad output dim to 128 lanes, keep f32 (tiny, 64 KB).
    w2_t = jnp.zeros((HID_DIM, OUT_PAD), jnp.float32)
    w2_t = w2_t.at[:, :OUT_DIM].set(w2.T.astype(jnp.float32))

    # ---- activation prep ----------------------------------------------------
    # Batch tile: cap so VMEM stays comfortable on all chips (bf16 x tile of
    # 256x896 is ~0.45 MB per buffer), and shrink for tiny batches.
    tm = min(tm, _round_up(B, 8))
    b_pad = _round_up(B, tm)
    x_p = jnp.zeros((b_pad, IN_PAD), jnp.bfloat16)
    x_p = x_p.at[:B, :IN_DIM].set(x.astype(jnp.bfloat16))

    grid = (b_pad // tm,)

    out = pl.pallas_call(
        bobnet_kernel,
        out_shape=jax.ShapeDtypeStruct((b_pad, OUT_PAD), jnp.float32),
        grid=grid,
        in_specs=[
            # x: tiled over the batch -> double-buffered behind compute.
            pl.BlockSpec((tm, IN_PAD), lambda i: (i, 0)),
            # weights: constant index_map -> stay resident in VMEM.
            pl.BlockSpec((IN_PAD, HID_DIM), lambda i: (0, 0)),
            pl.BlockSpec((HID_DIM, OUT_PAD), lambda i: (0, 0)),
        ],
        out_specs=pl.BlockSpec((tm, OUT_PAD), lambda i: (i, 0)),
        compiler_params=pltpu.CompilerParams(
            # batch axis is independent -> shard across TensorCores on v7x.
            dimension_semantics=("parallel",),
        ),
    )(x_p, w1_t, w2_t)

    # Slice away the batch padding and the zero output columns.
    return out[:B, :OUT_DIM]


def _reference_bf16_consistent(x, w1, w2):
    """Same math as the kernel (bf16-rounded x/w1, f32 accumulation)."""
    x_bf = x.astype(jnp.bfloat16).astype(jnp.float32)
    w1_bf = w1.astype(jnp.bfloat16).astype(jnp.float32)
    return jnp.maximum(x_bf @ w1_bf.T, 0.0) @ w2.T


if __name__ == "__main__":
    key = jax.random.PRNGKey(0)
    k_x, k_w1, k_w2, k_x2 = jax.random.split(key, 4)

    # PyTorch nn.Linear-style init: uniform(-1/sqrt(fan_in), 1/sqrt(fan_in)),
    # weights stored (out, in) exactly like the torch module.
    bound1 = 1.0 / jnp.sqrt(jnp.float32(IN_DIM))
    bound2 = 1.0 / jnp.sqrt(jnp.float32(HID_DIM))
    w1 = jax.random.uniform(k_w1, (HID_DIM, IN_DIM), jnp.float32, -bound1, bound1)
    w2 = jax.random.uniform(k_w2, (OUT_DIM, HID_DIM), jnp.float32, -bound2, bound2)

    # --- small batch (B=8): single grid step ---------------------------------
    B = 8
    x = jax.random.normal(k_x, (B, IN_DIM), dtype=jnp.float32)
    out = jax.block_until_ready(bobnet_forward(x, w1, w2))
    assert out.shape == (B, OUT_DIM)
    ref = _reference_bf16_consistent(x, w1, w2)
    assert jnp.allclose(out, ref, atol=1e-3, rtol=1e-3)
    # loose sanity vs. pure-f32 semantics of the original module
    ref_f32 = jnp.maximum(x @ w1.T, 0.0) @ w2.T
    assert jnp.allclose(out, ref_f32, atol=3e-2, rtol=3e-2)

    # --- larger batch (B=512): exercises the tiled, pipelined path -----------
    B2 = 512
    x2 = jax.random.normal(k_x2, (B2, IN_DIM), dtype=jnp.float32)
    out2 = jax.block_until_ready(bobnet_forward(x2, w1, w2, tm=256))
    assert out2.shape == (B2, OUT_DIM)
    ref2 = _reference_bf16_consistent(x2, w1, w2)
    assert jnp.allclose(out2, ref2, atol=1e-3, rtol=1e-3)

    print("KERNEL_OK")
</pallas_src>

<mosaic_0001>
module attributes {stable_mosaic.version = 11 : i64} {
  func.func @bobnet_kernel(%arg0: i32, %arg1: memref<8x896xbf16, #tpu.memory_space<vmem>>, %arg2: memref<896x128xbf16, #tpu.memory_space<vmem>>, %arg3: memref<128x128xf32, #tpu.memory_space<vmem>>, %arg4: memref<8x128xf32, #tpu.memory_space<vmem>>) attributes {dimension_semantics = [#tpu.dimension_semantics<parallel>], iteration_bounds = array<i64: 1>, scalar_prefetch = 0 : i64, scratch_operands = 0 : i64, tpu.core_type = #tpu.core_type<tc>, window_params = [{transform_indices = @transform_0, window_bounds = array<i64: 8, 896>}, {pipeline_mode = #tpu.pipeline_mode<synchronous>, transform_indices = @transform_1, window_bounds = array<i64: 896, 128>}, {pipeline_mode = #tpu.pipeline_mode<synchronous>, transform_indices = @transform_2, window_bounds = array<i64: 128, 128>}, {transform_indices = @transform_3, window_bounds = array<i64: 8, 128>}]} {
    %c0 = arith.constant 0 : index
    %c0_0 = arith.constant 0 : index
    %0 = vector.load %arg1[%c0, %c0_0] : memref<8x896xbf16, #tpu.memory_space<vmem>>, vector<8x896xbf16>
    %c0_1 = arith.constant 0 : index
    %c0_2 = arith.constant 0 : index
    %1 = vector.load %arg2[%c0_1, %c0_2] : memref<896x128xbf16, #tpu.memory_space<vmem>>, vector<896x128xbf16>
    %cst = arith.constant dense<0.000000e+00> : vector<8x128xf32>
    %2 = tpu.matmul %0, %1, %cst {dimension_numbers = #tpu.dot_dimension_numbers<[1], [0], [0], [1], [0, 0, 1, 1], [], []>} : vector<8x896xbf16>, vector<896x128xbf16>, vector<8x128xf32> -> vector<8x128xf32>
    %cst_3 = arith.constant 0.000000e+00 : f32
    %3 = vector.broadcast %cst_3 : f32 to vector<8x128xf32>
    %4 = arith.maximumf %2, %3 : vector<8x128xf32>
    %c0_4 = arith.constant 0 : index
    %c0_5 = arith.constant 0 : index
    %5 = vector.load %arg3[%c0_4, %c0_5] : memref<128x128xf32, #tpu.memory_space<vmem>>, vector<128x128xf32>
    %cst_6 = arith.constant dense<0.000000e+00> : vector<8x128xf32>
    %6 = tpu.matmul %4, %5, %cst_6 {dimension_numbers = #tpu.dot_dimension_numbers<[1], [0], [0], [1], [0, 0, 1, 1], [], []>} : vector<8x128xf32>, vector<128x128xf32>, vector<8x128xf32> -> vector<8x128xf32>
    %c0_7 = arith.constant 0 : index
    %c0_8 = arith.constant 0 : index
    %7 = vector.load %arg4[%c0_7, %c0_8] : memref<8x128xf32, #tpu.memory_space<vmem>>, vector<8x128xf32>
    tpu.vector_store %arg4[%c0_7, %c0_8], %6 {strides = array<i32>} : memref<8x128xf32, #tpu.memory_space<vmem>>, vector<8x128xf32>,
    return
  }
  func.func @transform_0(%arg0: i32) -> (i32, i32) {
    %c0_i32 = arith.constant 0 : i32
    %c0_i32_0 = arith.constant 0 : i32
    return %arg0, %c0_i32 : i32, i32
  }
  func.func @transform_1(%arg0: i32) -> (i32, i32) {
    %c0_i32 = arith.constant 0 : i32
    %c0_i32_0 = arith.constant 0 : i32
    %c0_i32_1 = arith.constant 0 : i32
    return %c0_i32, %c0_i32_0 : i32, i32
  }
  func.func @transform_2(%arg0: i32) -> (i32, i32) {
    %c0_i32 = arith.constant 0 : i32
    %c0_i32_0 = arith.constant 0 : i32
    %c0_i32_1 = arith.constant 0 : i32
    return %c0_i32, %c0_i32_0 : i32, i32
  }
  func.func @transform_3(%arg0: i32) -> (i32, i32) {
    %c0_i32 = arith.constant 0 : i32
    %c0_i32_0 = arith.constant 0 : i32
    return %arg0, %c0_i32 : i32, i32
  }
}

</mosaic_0001>

<llo_original>
// kernel: tpu_custom_call.1
$region0: #{tpu_custom_call.1}
  #allocation0 [shape = 'u32[]', space=smem, size = 0x4, offset = 0x4, fixed_abs, tag = 'smem constant byte address 0x4 - core index']
  #allocation1 [shape = 'u32[144,128]{1,0:T(1,128)}', space=vmem, size = 0x12000, scoped, tag = 'internal scratch']
  %s0 = inlined_call_operand.hbm [shape: bf16[8,896], index: 0, kind: input, shape index: {}]
  %s1 = inlined_call_operand.hbm [shape: bf16[896,128], index: 1, kind: input, shape index: {}]
  %s2 = inlined_call_operand.hbm [shape: f32[128,128], index: 2, kind: input, shape index: {}]
  %s3 = inlined_call_operand.hbm [shape: f32[8,128], index: 3, kind: output, shape index: {}]
  %s4 = sld [smem:[#allocation0]]
  $region34: #{tpu_custom_call.1} parent=0
    _
  %s6 = ssub.s32 1, %s4
  %s7 = scalar_select 0, %s6, %s4
  $region1: #{tpu_custom_call.1} parent=0
    #allocation2 [shape = 'u8[14336]{0}', space=vmem, size = 0x3800, scoped, tag = 'input window, operand 0, single buffered']
    #allocation3 [shape = 's32[1]{0}', space=sflag, size = 0x4, scoped, tag = 'scoped memory for tpu_custom_call.1']
    #allocation4 [shape = 's32[1]{0}', space=sflag, size = 0x4, scoped, tag = 'scoped memory for tpu_custom_call.1']
    #allocation5 [shape = 'u8[229376]{0}', space=vmem, size = 0x38000, scoped, tag = 'input window, operand 1, single buffered']
    #allocation6 [shape = 's32[1]{0}', space=sflag, size = 0x4, scoped, tag = 'scoped memory for tpu_custom_call.1']
    #allocation7 [shape = 'u8[65536]{0}', space=vmem, size = 0x10000, scoped, tag = 'input window, operand 2, single buffered']
    #allocation8 [shape = 'u8[4096]{0}', space=vmem, size = 0x1000, scoped, tag = 'output window, operand 0, single buffered']
    %8 = vsyncpa [#allocation3], 0
    %9 = vsyncpa [#allocation6], 0
    %10 = vsyncpa [#allocation4], 0
    // Predicated region
    $region2: #{tpu_custom_call.1} parent=1 // pred_check
      _
    $region3: #{tpu_custom_call.1} parent=1 // pred_check_branch
      %12 = sbr.rel (0) target = $region5
    $region4: #{tpu_custom_call.1} parent=1 // pred_region
      %s14 = ssub.s32 448, 448
      %15 = vsyncadd [#allocation3], %s14
      %s17 = sshll.u32 [#allocation2], 4
      %s18 = int_to_ptr.vmem [resolvable:$true] %s17
      %20 = dma.hbm_to_vmem [thread:$0]  %s0, 448, %s18, [#allocation3]
    $region5: #{tpu_custom_call.1} parent=1 // pred_fallthru
      _
    // Predicated region
    $region6: #{tpu_custom_call.1} parent=1 // pred_check
      _
    $region7: #{tpu_custom_call.1} parent=1 // pred_check_branch
      %22 = sbr.rel (0) target = $region9
    $region8: #{tpu_custom_call.1} parent=1 // pred_region
      %s24 = ssub.s32 7168, 7168
      %25 = vsyncadd [#allocation6], %s24
      %s26 = sshll.u32 [#allocation5], 4
      %s27 = int_to_ptr.vmem [resolvable:$true] %s26
      %32 = dma.hbm_to_vmem [thread:$0]  %s1, 7168, %s27, [#allocation6], 64, 64, 4
    $region9: #{tpu_custom_call.1} parent=1 // pred_fallthru
      _
    // Predicated region
    $region10: #{tpu_custom_call.1} parent=1 // pred_check
      _
    $region11: #{tpu_custom_call.1} parent=1 // pred_check_branch
      %34 = sbr.rel (0) target = $region13
    $region12: #{tpu_custom_call.1} parent=1 // pred_region
      %s36 = ssub.s32 2048, 2048
      %37 = vsyncadd [#allocation6], %s36
      %s38 = sshll.u32 [#allocation7], 4
      %s39 = int_to_ptr.vmem [resolvable:$true] %s38
      %44 = dma.hbm_to_vmem [thread:$0]  %s2, 2048, %s39, [#allocation6], 128, 128, 8
    $region13: #{tpu_custom_call.1} parent=1 // pred_fallthru
      _
    // Predicated region
    $region14: #{tpu_custom_call.1} parent=1 // pred_check
      _
    $region15: #{tpu_custom_call.1} parent=1 // pred_check_branch
      %46 = sbr.rel (0) target = $region17
    $region16: #{tpu_custom_call.1} parent=1 // pred_region
      %47 = dma.done [#allocation3], 448
    $region17: #{tpu_custom_call.1} parent=1 // pred_fallthru
      _
    // Predicated region
    $region18: #{tpu_custom_call.1} parent=1 // pred_check
      _
    $region19: #{tpu_custom_call.1} parent=1 // pred_check_branch
      %49 = sbr.rel (0) target = $region21
    $region20: #{tpu_custom_call.1} parent=1 // pred_region
      %50 = dma.done [#allocation6], 7168
    $region21: #{tpu_custom_call.1} parent=1 // pred_fallthru
      _
    // Predicated region
    $region22: #{tpu_custom_call.1} parent=1 // pred_check
      _
    $region23: #{tpu_custom_call.1} parent=1 // pred_check_branch
      %52 = sbr.rel (0) target = $region25
    $region24: #{tpu_custom_call.1} parent=1 // pred_region
      %53 = dma.done [#allocation6], 2048
    $region25: #{tpu_custom_call.1} parent=1 // pred_fallthru
      _
    %v55 = vld [vmem:[#allocation2] sm:$0xff]
    %v56 = vld [vmem:[#allocation2 + $0x8] sm:$0xff]
    %v57 = vld [vmem:[#allocation2 + $0x10] sm:$0xff]
    %v58 = vld [vmem:[#allocation2 + $0x18] sm:$0xf]
    %v59 = vld [vmem:[#allocation5] sm:$0xf]
    %v60 = vld [vmem:[#allocation5 + $0x4] sm:$0xf]
    %v61 = vld [vmem:[#allocation5 + $0x8] sm:$0xf]
    %v62 = vld [vmem:[#allocation5 + $0xc] sm:$0xf]
    %v63 = vld [vmem:[#allocation5 + $0x10] sm:$0xf]
    %v64 = vld [vmem:[#allocation5 + $0x14] sm:$0xf]
    %v65 = vld [vmem:[#allocation5 + $0x18] sm:$0xf]
    %v66 = vld [vmem:[#allocation5 + $0x1c] sm:$0xf]
    %v67 = vld [vmem:[#allocation5 + $0x20] sm:$0xf]
    %v68 = vld [vmem:[#allocation5 + $0x24] sm:$0xf]
    %v69 = vld [vmem:[#allocation5 + $0x28] sm:$0xf]
    %v70 = vld [vmem:[#allocation5 + $0x2c] sm:$0xf]
    %v71 = vld [vmem:[#allocation5 + $0x30] sm:$0xf]
    %v72 = vld [vmem:[#allocation5 + $0x34] sm:$0xf]
    %v73 = vld [vmem:[#allocation5 + $0x38] sm:$0xf]
    %v74 = vld [vmem:[#allocation5 + $0x3c] sm:$0xf]
    %v75 = vld [vmem:[#allocation5 + $0x40] sm:$0xf]
    %v76 = vld [vmem:[#allocation5 + $0x44] sm:$0xf]
    %v77 = vld [vmem:[#allocation5 + $0x48] sm:$0xf]
    %v78 = vld [vmem:[#allocation5 + $0x4c] sm:$0xf]
    %v79 = vld [vmem:[#allocation5 + $0x50] sm:$0xf]
    %v80 = vld [vmem:[#allocation5 + $0x54] sm:$0xf]
    %v81 = vld [vmem:[#allocation5 + $0x58] sm:$0xf]
    %v82 = vld [vmem:[#allocation5 + $0x5c] sm:$0xf]
    %v83 = vld [vmem:[#allocation5 + $0x60] sm:$0xf]
    %v84 = vld [vmem:[#allocation5 + $0x64] sm:$0xf]
    %v85 = vld [vmem:[#allocation5 + $0x68] sm:$0xf]
    %v86 = vld [vmem:[#allocation5 + $0x6c] sm:$0xf]
    %v87 = vld [vmem:[#allocation5 + $0x70] sm:$0xf]
    %v88 = vld [vmem:[#allocation5 + $0x74] sm:$0xf]
    %v89 = vld [vmem:[#allocation5 + $0x78] sm:$0xf]
    %v90 = vld [vmem:[#allocation5 + $0x7c] sm:$0xf]
    %v91 = vld [vmem:[#allocation5 + $0x80] sm:$0xf]
    %v92 = vld [vmem:[#allocation5 + $0x84] sm:$0xf]
    %v93 = vld [vmem:[#allocation5 + $0x88] sm:$0xf]
    %v94 = vld [vmem:[#allocation5 + $0x8c] sm:$0xf]
    %v95 = vld [vmem:[#allocation5 + $0x90] sm:$0xf]
    %v96 = vld [vmem:[#allocation5 + $0x94] sm:$0xf]
    %v97 = vld [vmem:[#allocation5 + $0x98] sm:$0xf]
    %v98 = vld [vmem:[#allocation5 + $0x9c] sm:$0xf]
    %v99 = vld [vmem:[#allocation5 + $0xa0] sm:$0xf]
    %v100 = vld [vmem:[#allocation5 + $0xa4] sm:$0xf]
    %v101 = vld [vmem:[#allocation5 + $0xa8] sm:$0xf]
    %v102 = vld [vmem:[#allocation5 + $0xac] sm:$0xf]
    %v103 = vld [vmem:[#allocation5 + $0xb0] sm:$0xf]
    %v104 = vld [vmem:[#allocation5 + $0xb4] sm:$0xf]
    %v105 = vld [vmem:[#allocation5 + $0xb8] sm:$0xf]
    %v106 = vld [vmem:[#allocation5 + $0xbc] sm:$0xf]
    %v107 = vld [vmem:[#allocation5 + $0xc0] sm:$0xf]
    %v108 = vld [vmem:[#allocation5 + $0xc4] sm:$0xf]
    %v109 = vld [vmem:[#allocation5 + $0xc8] sm:$0xf]
    %v110 = vld [vmem:[#allocation5 + $0xcc] sm:$0xf]
    %v111 = vld [vmem:[#allocation5 + $0xd0] sm:$0xf]
    %v112 = vld [vmem:[#allocation5 + $0xd4] sm:$0xf]
    %v113 = vld [vmem:[#allocation5 + $0xd8] sm:$0xf]
    %v114 = vld [vmem:[#allocation5 + $0xdc] sm:$0xf]
    %v115 = vld [vmem:[#allocation5 + $0xe0] sm:$0xf]
    %v116 = vld [vmem:[#allocation5 + $0xe4] sm:$0xf]
    %v117 = vld [vmem:[#allocation5 + $0xe8] sm:$0xf]
    %v118 = vld [vmem:[#allocation5 + $0xec] sm:$0xf]
    %v119 = vld [vmem:[#allocation5 + $0xf0] sm:$0xf]
    %v120 = vld [vmem:[#allocation5 + $0xf4] sm:$0xf]
    %v121 = vld [vmem:[#allocation5 + $0xf8] sm:$0xf]
    %v122 = vld [vmem:[#allocation5 + $0xfc] sm:$0xf]
    %v123 = vld [vmem:[#allocation5 + $0x100] sm:$0xf]
    %v124 = vld [vmem:[#allocation5 + $0x104] sm:$0xf]
    %v125 = vld [vmem:[#allocation5 + $0x108] sm:$0xf]
    %v126 = vld [vmem:[#allocation5 + $0x10c] sm:$0xf]
    %v127 = vld [vmem:[#allocation5 + $0x110] sm:$0xf]
    %v128 = vld [vmem:[#allocation5 + $0x114] sm:$0xf]
    %v129 = vld [vmem:[#allocation5 + $0x118] sm:$0xf]
    %v130 = vld [vmem:[#allocation5 + $0x11c] sm:$0xf]
    %v131 = vld [vmem:[#allocation5 + $0x120] sm:$0xf]
    %v132 = vld [vmem:[#allocation5 + $0x124] sm:$0xf]
    %v133 = vld [vmem:[#allocation5 + $0x128] sm:$0xf]
    %v134 = vld [vmem:[#allocation5 + $0x12c] sm:$0xf]
    %v135 = vld [vmem:[#allocation5 + $0x130] sm:$0xf]
    %v136 = vld [vmem:[#allocation5 + $0x134] sm:$0xf]
    %v137 = vld [vmem:[#allocation5 + $0x138] sm:$0xf]
    %v138 = vld [vmem:[#allocation5 + $0x13c] sm:$0xf]
    %v139 = vld [vmem:[#allocation5 + $0x140] sm:$0xf]
    %v140 = vld [vmem:[#allocation5 + $0x144] sm:$0xf]
    %v141 = vld [vmem:[#allocation5 + $0x148] sm:$0xf]
    %v142 = vld [vmem:[#allocation5 + $0x14c] sm:$0xf]
    %v143 = vld [vmem:[#allocation5 + $0x150] sm:$0xf]
    %v144 = vld [vmem:[#allocation5 + $0x154] sm:$0xf]
    %v145 = vld [vmem:[#allocation5 + $0x158] sm:$0xf]
    %v146 = vld [vmem:[#allocation5 + $0x15c] sm:$0xf]
    %v147 = vld [vmem:[#allocation5 + $0x160] sm:$0xf]
    %v148 = vld [vmem:[#allocation5 + $0x164] sm:$0xf]
    %v149 = vld [vmem:[#allocation5 + $0x168] sm:$0xf]
    %v150 = vld [vmem:[#allocation5 + $0x16c] sm:$0xf]
    %v151 = vld [vmem:[#allocation5 + $0x170] sm:$0xf]
    %v152 = vld [vmem:[#allocation5 + $0x174] sm:$0xf]
    %v153 = vld [vmem:[#allocation5 + $0x178] sm:$0xf]
    %v154 = vld [vmem:[#allocation5 + $0x17c] sm:$0xf]
    %v155 = vld [vmem:[#allocation5 + $0x180] sm:$0xf]
    %v156 = vld [vmem:[#allocation5 + $0x184] sm:$0xf]
    %v157 = vld [vmem:[#allocation5 + $0x188] sm:$0xf]
    %v158 = vld [vmem:[#allocation5 + $0x18c] sm:$0xf]
    %v159 = vld [vmem:[#allocation5 + $0x190] sm:$0xf]
    %v160 = vld [vmem:[#allocation5 + $0x194] sm:$0xf]
    %v161 = vld [vmem:[#allocation5 + $0x198] sm:$0xf]
    %v162 = vld [vmem:[#allocation5 + $0x19c] sm:$0xf]
    %v163 = vld [vmem:[#allocation5 + $0x1a0] sm:$0xf]
    %v164 = vld [vmem:[#allocation5 + $0x1a4] sm:$0xf]
    %v165 = vld [vmem:[#allocation5 + $0x1a8] sm:$0xf]
    %v166 = vld [vmem:[#allocation5 + $0x1ac] sm:$0xf]
    %v167 = vld [vmem:[#allocation5 + $0x1b0] sm:$0xf]
    %v168 = vld [vmem:[#allocation5 + $0x1b4] sm:$0xf]
    %v169 = vld [vmem:[#allocation5 + $0x1b8] sm:$0xf]
    %v170 = vld [vmem:[#allocation5 + $0x1bc] sm:$0xf]
    %v175 = vunpack.c.l.b16 %v55
    %v176 = vunpack.c.h.b16 %v55
    %v177 = vunpack.c.l.b16 %v56
    %v178 = vunpack.c.h.b16 %v56
    %v179 = vunpack.c.l.b16 %v57
    %v180 = vunpack.c.h.b16 %v57
    %v181 = vunpack.c.l.b16 %v58
    %v182 = vpack.c.b16 %v175, %v175
    %v183 = vpack.c.b16 %v176, %v176
    %v184 = vpack.c.b16 %v177, %v177
    %v185 = vpack.c.b16 %v178, %v178
    %v186 = vpack.c.b16 %v179, %v179
    %v187 = vpack.c.b16 %v180, %v180
    %v188 = vpack.c.b16 %v181, %v181
    %v308 = vunpack.c.l.b16 %v59
    %v309 = vunpack.c.l.b16 %v60
    %v310 = vunpack.c.l.b16 %v61
    %v311 = vunpack.c.l.b16 %v62
    %v312 = vunpack.c.l.b16 %v63
    %v313 = vunpack.c.l.b16 %v64
    %v314 = vunpack.c.l.b16 %v65
    %v315 = vunpack.c.l.b16 %v66
    %v316 = vunpack.c.l.b16 %v67
    %v317 = vunpack.c.l.b16 %v68
    %v318 = vunpack.c.l.b16 %v69
    %v319 = vunpack.c.l.b16 %v70
    %v320 = vunpack.c.l.b16 %v71
    %v321 = vunpack.c.l.b16 %v72
    %v322 = vunpack.c.l.b16 %v73
    %v323 = vunpack.c.l.b16 %v74
    %v324 = vunpack.c.l.b16 %v75
    %v325 = vunpack.c.l.b16 %v76
    %v326 = vunpack.c.l.b16 %v77
    %v327 = vunpack.c.l.b16 %v78
    %v328 = vunpack.c.l.b16 %v79
    %v329 = vunpack.c.l.b16 %v80
    %v330 = vunpack.c.l.b16 %v81
    %v331 = vunpack.c.l.b16 %v82
    %v332 = vunpack.c.l.b16 %v83
    %v333 = vunpack.c.l.b16 %v84
    %v334 = vunpack.c.l.b16 %v85
    %v335 = vunpack.c.l.b16 %v86
    %v336 = vunpack.c.l.b16 %v87
    %v337 = vunpack.c.l.b16 %v88
    %v338 = vunpack.c.l.b16 %v89
    %v339 = vunpack.c.l.b16 %v90
    %v340 = vunpack.c.l.b16 %v91
    %v341 = vunpack.c.l.b16 %v92
    %v342 = vunpack.c.l.b16 %v93
    %v343 = vunpack.c.l.b16 %v94
    %v344 = vunpack.c.l.b16 %v95
    %v345 = vunpack.c.l.b16 %v96
    %v346 = vunpack.c.l.b16 %v97
    %v347 = vunpack.c.l.b16 %v98
    %v348 = vunpack.c.l.b16 %v99
    %v349 = vunpack.c.l.b16 %v100
    %v350 = vunpack.c.l.b16 %v101
    %v351 = vunpack.c.l.b16 %v102
    %v352 = vunpack.c.l.b16 %v103
    %v353 = vunpack.c.l.b16 %v104
    %v354 = vunpack.c.l.b16 %v105
    %v355 = vunpack.c.l.b16 %v106
    %v356 = vunpack.c.l.b16 %v107
    %v357 = vunpack.c.l.b16 %v108
    %v358 = vunpack.c.l.b16 %v109
    %v359 = vunpack.c.l.b16 %v110
    %v360 = vunpack.c.l.b16 %v111
    %v361 = vunpack.c.l.b16 %v112
    %v362 = vunpack.c.l.b16 %v113
    %v363 = vunpack.c.l.b16 %v114
    %v364 = vunpack.c.l.b16 %v115
    %v365 = vunpack.c.l.b16 %v116
    %v366 = vunpack.c.l.b16 %v117
    %v367 = vunpack.c.l.b16 %v118
    %v368 = vunpack.c.l.b16 %v119
    %v369 = vunpack.c.l.b16 %v120
    %v370 = vunpack.c.l.b16 %v121
    %v371 = vunpack.c.l.b16 %v122
    %v372 = vunpack.c.l.b16 %v123
    %v373 = vunpack.c.l.b16 %v124
    %v374 = vunpack.c.l.b16 %v125
    %v375 = vunpack.c.l.b16 %v126
    %v376 = vunpack.c.l.b16 %v127
    %v377 = vunpack.c.l.b16 %v128
    %v378 = vunpack.c.l.b16 %v129
    %v379 = vunpack.c.l.b16 %v130
    %v380 = vunpack.c.l.b16 %v131
    %v381 = vunpack.c.l.b16 %v132
    %v382 = vunpack.c.l.b16 %v133
    %v383 = vunpack.c.l.b16 %v134
    %v384 = vunpack.c.l.b16 %v135
    %v385 = vunpack.c.l.b16 %v136
    %v386 = vunpack.c.l.b16 %v137
    %v387 = vunpack.c.l.b16 %v138
    %v388 = vunpack.c.l.b16 %v139
    %v389 = vunpack.c.l.b16 %v140
    %v390 = vunpack.c.l.b16 %v141
    %v391 = vunpack.c.l.b16 %v142
    %v392 = vunpack.c.l.b16 %v143
    %v393 = vunpack.c.l.b16 %v144
    %v394 = vunpack.c.l.b16 %v145
    %v395 = vunpack.c.l.b16 %v146
    %v396 = vunpack.c.l.b16 %v147
    %v397 = vunpack.c.l.b16 %v148
    %v398 = vunpack.c.l.b16 %v149
    %v399 = vunpack.c.l.b16 %v150
    %v400 = vunpack.c.l.b16 %v151
    %v401 = vunpack.c.l.b16 %v152
    %v402 = vunpack.c.l.b16 %v153
    %v403 = vunpack.c.l.b16 %v154
    %v404 = vunpack.c.l.b16 %v155
    %v405 = vunpack.c.l.b16 %v156
    %v406 = vunpack.c.l.b16 %v157
    %v407 = vunpack.c.l.b16 %v158
    %v408 = vunpack.c.l.b16 %v159
    %v409 = vunpack.c.l.b16 %v160
    %v410 = vunpack.c.l.b16 %v161
    %v411 = vunpack.c.l.b16 %v162
    %v412 = vunpack.c.l.b16 %v163
    %v413 = vunpack.c.l.b16 %v164
    %v414 = vunpack.c.l.b16 %v165
    %v415 = vunpack.c.l.b16 %v166
    %v416 = vunpack.c.l.b16 %v167
    %v417 = vunpack.c.l.b16 %v168
    %v418 = vunpack.c.l.b16 %v169
    %v419 = vunpack.c.l.b16 %v170
    %v420 = vpack.c.b16 %v309, %v308
    %v421 = vpack.c.b16 %v311, %v310
    %v422 = vpack.c.b16 %v313, %v312
    %v423 = vpack.c.b16 %v315, %v314
    %v424 = vpack.c.b16 %v317, %v316
    %v425 = vpack.c.b16 %v319, %v318
    %v426 = vpack.c.b16 %v321, %v320
    %v427 = vpack.c.b16 %v323, %v322
    %v428 = vpack.c.b16 %v325, %v324
    %v429 = vpack.c.b16 %v327, %v326
    %v430 = vpack.c.b16 %v329, %v328
    %v431 = vpack.c.b16 %v331, %v330
    %v432 = vpack.c.b16 %v333, %v332
    %v433 = vpack.c.b16 %v335, %v334
    %v434 = vpack.c.b16 %v337, %v336
    %v435 = vpack.c.b16 %v339, %v338
    %v436 = vpack.c.b16 %v341, %v340
    %v437 = vpack.c.b16 %v343, %v342
    %v438 = vpack.c.b16 %v345, %v344
    %v439 = vpack.c.b16 %v347, %v346
    %v440 = vpack.c.b16 %v349, %v348
    %v441 = vpack.c.b16 %v351, %v350
    %v442 = vpack.c.b16 %v353, %v352
    %v443 = vpack.c.b16 %v355, %v354
    %v444 = vpack.c.b16 %v357, %v356
    %v445 = vpack.c.b16 %v359, %v358
    %v446 = vpack.c.b16 %v361, %v360
    %v447 = vpack.c.b16 %v363, %v362
    %v448 = vpack.c.b16 %v365, %v364
    %v449 = vpack.c.b16 %v367, %v366
    %v450 = vpack.c.b16 %v369, %v368
    %v451 = vpack.c.b16 %v371, %v370
    %v452 = vpack.c.b16 %v373, %v372
    %v453 = vpack.c.b16 %v375, %v374
    %v454 = vpack.c.b16 %v377, %v376
    %v455 = vpack.c.b16 %v379, %v378
    %v456 = vpack.c.b16 %v381, %v380
    %v457 = vpack.c.b16 %v383, %v382
    %v458 = vpack.c.b16 %v385, %v384
    %v459 = vpack.c.b16 %v387, %v386
    %v460 = vpack.c.b16 %v389, %v388
    %v461 = vpack.c.b16 %v391, %v390
    %v462 = vpack.c.b16 %v393, %v392
    %v463 = vpack.c.b16 %v395, %v394
    %v464 = vpack.c.b16 %v397, %v396
    %v465 = vpack.c.b16 %v399, %v398
    %v466 = vpack.c.b16 %v401, %v400
    %v467 = vpack.c.b16 %v403, %v402
    %v468 = vpack.c.b16 %v405, %v404
    %v469 = vpack.c.b16 %v407, %v406
    %v470 = vpack.c.b16 %v409, %v408
    %v471 = vpack.c.b16 %v411, %v410
    %v472 = vpack.c.b16 %v413, %v412
    %v473 = vpack.c.b16 %v415, %v414
    %v474 = vpack.c.b16 %v417, %v416
    %v475 = vpack.c.b16 %v419, %v418
    %532 = vmatprep.subr.bf16.mxu0 0
    %533 = vmatpush1.bf16.msra.mxu0 %v420
    %534 = vmatprep.subr.bf16.mxu0 0
    %535 = vmatpush1.bf16.msra.mxu0 %v421
    %536 = vmatprep.subr.bf16.mxu0 0
    %537 = vmatpush1.bf16.msra.mxu0 %v422
    %538 = vmatprep.subr.bf16.mxu0 0
    %539 = vmatpush1.bf16.msra.mxu0 %v423
    %540 = vmatprep.subr.bf16.mxu0 0
    %541 = vmatpush1.bf16.msra.mxu0 %v424
    %542 = vmatprep.subr.bf16.mxu0 0
    %543 = vmatpush1.bf16.msra.mxu0 %v425
    %544 = vmatprep.subr.bf16.mxu0 0
    %545 = vmatpush1.bf16.msra.mxu0 %v426
    %546 = vmatprep.subr.bf16.mxu0 0
    %547 = vmatpush1.bf16.msra.mxu0 %v427
    %548 = vmatprep.subr.bf16.mxu0 0
    %549 = vmatpush1.bf16.msra.mxu0 %v428
    %550 = vmatprep.subr.bf16.mxu0 0
    %551 = vmatpush1.bf16.msra.mxu0 %v429
    %552 = vmatprep.subr.bf16.mxu0 0
    %553 = vmatpush1.bf16.msra.mxu0 %v430
    %554 = vmatprep.subr.bf16.mxu0 0
    %555 = vmatpush1.bf16.msra.mxu0 %v431
    %556 = vmatprep.subr.bf16.mxu0 0
    %557 = vmatpush1.bf16.msra.mxu0 %v432
    %558 = vmatprep.subr.bf16.mxu0 0
    %559 = vmatpush1.bf16.msra.mxu0 %v433
    %560 = vmatprep.subr.bf16.mxu0 0
    %561 = vmatpush1.bf16.msra.mxu0 %v434
    %562 = vmatprep.subr.bf16.mxu0 0
    %563 = vmatpush1.bf16.msra.mxu0 %v435
    %564 = vmatprep.mubr.bf16.mxu0 %v183
    %565 = vmatmul.mubr.bf16.gmra.mrb[0].mxu0 %v182
    %v566 = vpop.f32.mrb[0].mxu0
    %v567 = vadd.f32 0.0, %v566
    %v568 = vpop.f32.mrb[0].mxu0
    %v569 = vpop.f32.mrb[0].mxu0
    %v570 = vpop.f32.mrb[0].mxu0
    %571 = vdwg.mxu0
    %572 = vmatprep.subr.bf16.mxu0 0
    %573 = vmatpush1.bf16.msra.mxu0 %v436
    %574 = vmatprep.subr.bf16.mxu0 0
    %575 = vmatpush1.bf16.msra.mxu0 %v437
    %576 = vmatprep.subr.bf16.mxu0 0
    %577 = vmatpush1.bf16.msra.mxu0 %v438
    %578 = vmatprep.subr.bf16.mxu0 0
    %579 = vmatpush1.bf16.msra.mxu0 %v439
    %580 = vmatprep.subr.bf16.mxu0 0
    %581 = vmatpush1.bf16.msra.mxu0 %v440
    %582 = vmatprep.subr.bf16.mxu0 0
    %583 = vmatpush1.bf16.msra.mxu0 %v441
    %584 = vmatprep.subr.bf16.mxu0 0
    %585 = vmatpush1.bf16.msra.mxu0 %v442
    %586 = vmatprep.subr.bf16.mxu0 0
    %587 = vmatpush1.bf16.msra.mxu0 %v443
    %588 = vmatprep.subr.bf16.mxu0 0
    %589 = vmatpush1.bf16.msra.mxu0 %v444
    %590 = vmatprep.subr.bf16.mxu0 0
    %591 = vmatpush1.bf16.msra.mxu0 %v445
    %592 = vmatprep.subr.bf16.mxu0 0
    %593 = vmatpush1.bf16.msra.mxu0 %v446
    %594 = vmatprep.subr.bf16.mxu0 0
    %595 = vmatpush1.bf16.msra.mxu0 %v447
    %596 = vmatprep.subr.bf16.mxu0 0
    %597 = vmatpush1.bf16.msra.mxu0 %v448
    %598 = vmatprep.subr.bf16.mxu0 0
    %599 = vmatpush1.bf16.msra.mxu0 %v449
    %600 = vmatprep.subr.bf16.mxu0 0
    %601 = vmatpush1.bf16.msra.mxu0 %v450
    %602 = vmatprep.subr.bf16.mxu0 0
    %603 = vmatpush1.bf16.msra.mxu0 %v451
    %604 = vmatprep.mubr.bf16.mxu0 %v185
    %605 = vmatmul.mubr.bf16.gmra.mrb[0].mxu0 %v184
    %v606 = vpop.f32.mrb[0].mxu0
    %v607 = vadd.f32 %v567, %v606
    %v608 = vpop.f32.mrb[0].mxu0
    %v609 = vpop.f32.mrb[0].mxu0
    %v610 = vpop.f32.mrb[0].mxu0
    %611 = vdwg.mxu0
    %612 = vmatprep.subr.bf16.mxu0 0
    %613 = vmatpush1.bf16.msra.mxu0 %v452
    %614 = vmatprep.subr.bf16.mxu0 0
    %615 = vmatpush1.bf16.msra.mxu0 %v453
    %616 = vmatprep.subr.bf16.mxu0 0
    %617 = vmatpush1.bf16.msra.mxu0 %v454
    %618 = vmatprep.subr.bf16.mxu0 0
    %619 = vmatpush1.bf16.msra.mxu0 %v455
    %620 = vmatprep.subr.bf16.mxu0 0
    %621 = vmatpush1.bf16.msra.mxu0 %v456
    %622 = vmatprep.subr.bf16.mxu0 0
    %623 = vmatpush1.bf16.msra.mxu0 %v457
    %624 = vmatprep.subr.bf16.mxu0 0
    %625 = vmatpush1.bf16.msra.mxu0 %v458
    %626 = vmatprep.subr.bf16.mxu0 0
    %627 = vmatpush1.bf16.msra.mxu0 %v459
    %628 = vmatprep.subr.bf16.mxu0 0
    %629 = vmatpush1.bf16.msra.mxu0 %v460
    %630 = vmatprep.subr.bf16.mxu0 0
    %631 = vmatpush1.bf16.msra.mxu0 %v461
    %632 = vmatprep.subr.bf16.mxu0 0
    %633 = vmatpush1.bf16.msra.mxu0 %v462
    %634 = vmatprep.subr.bf16.mxu0 0
    %635 = vmatpush1.bf16.msra.mxu0 %v463
    %636 = vmatprep.subr.bf16.mxu0 0
    %637 = vmatpush1.bf16.msra.mxu0 %v464
    %638 = vmatprep.subr.bf16.mxu0 0
    %639 = vmatpush1.bf16.msra.mxu0 %v465
    %640 = vmatprep.subr.bf16.mxu0 0
    %641 = vmatpush1.bf16.msra.mxu0 %v466
    %642 = vmatprep.subr.bf16.mxu0 0
    %643 = vmatpush1.bf16.msra.mxu0 %v467
    %644 = vmatprep.mubr.bf16.mxu0 %v187
    %645 = vmatmul.mubr.bf16.gmra.mrb[0].mxu0 %v186
    %v646 = vpop.f32.mrb[0].mxu0
    %v647 = vadd.f32 %v607, %v646
    %v648 = vpop.f32.mrb[0].mxu0
    %v649 = vpop.f32.mrb[0].mxu0
    %v650 = vpop.f32.mrb[0].mxu0
    %651 = vdwg.mxu0
    %652 = vmatprep.subr.bf16.mxu0 0
    %653 = vmatpush1.bf16.msra.mxu0 %v468
    %654 = vmatprep.subr.bf16.mxu0 0
    %655 = vmatpush1.bf16.msra.mxu0 %v469
    %656 = vmatprep.subr.bf16.mxu0 0
    %657 = vmatpush1.bf16.msra.mxu0 %v470
    %658 = vmatprep.subr.bf16.mxu0 0
    %659 = vmatpush1.bf16.msra.mxu0 %v471
    %660 = vmatprep.subr.bf16.mxu0 0
    %661 = vmatpush1.bf16.msra.mxu0 %v472
    %662 = vmatprep.subr.bf16.mxu0 0
    %663 = vmatpush1.bf16.msra.mxu0 %v473
    %664 = vmatprep.subr.bf16.mxu0 0
    %665 = vmatpush1.bf16.msra.mxu0 %v474
    %666 = vmatprep.subr.bf16.mxu0 0
    %667 = vmatpush1.bf16.msra.mxu0 %v475
    %668 = vmatprep.subr.bf16.mxu0 0
    %669 = vmatpush1.bf16.msra.mxu0 0
    %670 = vmatprep.subr.bf16.mxu0 0
    %671 = vmatpush1.bf16.msra.mxu0 0
    %672 = vmatprep.subr.bf16.mxu0 0
    %673 = vmatpush1.bf16.msra.mxu0 0
    %674 = vmatprep.subr.bf16.mxu0 0
    %675 = vmatpush1.bf16.msra.mxu0 0
    %676 = vmatprep.subr.bf16.mxu0 0
    %677 = vmatpush1.bf16.msra.mxu0 0
    %678 = vmatprep.subr.bf16.mxu0 0
    %679 = vmatpush1.bf16.msra.mxu0 0
    %680 = vmatprep.subr.bf16.mxu0 0
    %681 = vmatpush1.bf16.msra.mxu0 0
    %682 = vmatprep.subr.bf16.mxu0 0
    %683 = vmatpush1.bf16.msra.mxu0 0
    %684 = vmatprep.mubr.bf16.mxu0 0
    %685 = vmatmul.mubr.bf16.gmra.mrb[0].mxu0 %v188
    %v686 = vpop.f32.mrb[0].mxu0
    %v687 = vadd.f32 %v647, %v686
    %v688 = vpop.f32.mrb[0].mxu0
    %v689 = vpop.f32.mrb[0].mxu0
    %v690 = vpop.f32.mrb[0].mxu0
    %691 = vdwg.mxu0
    %v692 = vmax.f32 %v687, 0.0
    %v693 = vld [vmem:[#allocation7] sm:$0xff]
    %v694 = vld [vmem:[#allocation7 + $0x8] sm:$0xff]
    %v695 = vld [vmem:[#allocation7 + $0x10] sm:$0xff]
    %v696 = vld [vmem:[#allocation7 + $0x18] sm:$0xff]
    %v697 = vld [vmem:[#allocation7 + $0x20] sm:$0xff]
    %v698 = vld [vmem:[#allocation7 + $0x28] sm:$0xff]
    %v699 = vld [vmem:[#allocation7 + $0x30] sm:$0xff]
    %v700 = vld [vmem:[#allocation7 + $0x38] sm:$0xff]
    %v701 = vld [vmem:[#allocation7 + $0x40] sm:$0xff]
    %v702 = vld [vmem:[#allocation7 + $0x48] sm:$0xff]
    %v703 = vld [vmem:[#allocation7 + $0x50] sm:$0xff]
    %v704 = vld [vmem:[#allocation7 + $0x58] sm:$0xff]
    %v705 = vld [vmem:[#allocation7 + $0x60] sm:$0xff]
    %v706 = vld [vmem:[#allocation7 + $0x68] sm:$0xff]
    %v707 = vld [vmem:[#allocation7 + $0x70] sm:$0xff]
    %v708 = vld [vmem:[#allocation7 + $0x78] sm:$0xff]
    %709 = vmatprep.subr.mxu0 0.0
    %710 = vmatpush1.msra.mxu0 %v693
    %711 = vmatprep.subr.mxu0 0.0
    %712 = vmatpush1.msra.mxu0 %v694
    %713 = vmatprep.subr.mxu0 0.0
    %714 = vmatpush1.msra.mxu0 %v695
    %715 = vmatprep.subr.mxu0 0.0
    %716 = vmatpush1.msra.mxu0 %v696
    %717 = vmatprep.subr.mxu0 0.0
    %718 = vmatpush1.msra.mxu0 %v697
    %719 = vmatprep.subr.mxu0 0.0
    %720 = vmatpush1.msra.mxu0 %v698
    %721 = vmatprep.subr.mxu0 0.0
    %722 = vmatpush1.msra.mxu0 %v699
    %723 = vmatprep.subr.mxu0 0.0
    %724 = vmatpush1.msra.mxu0 %v700
    %725 = vmatprep.subr.mxu0 0.0
    %726 = vmatpush1.msra.mxu0 %v701
    %727 = vmatprep.subr.mxu0 0.0
    %728 = vmatpush1.msra.mxu0 %v702
    %729 = vmatprep.subr.mxu0 0.0
    %730 = vmatpush1.msra.mxu0 %v703
    %731 = vmatprep.subr.mxu0 0.0
    %732 = vmatpush1.msra.mxu0 %v704
    %733 = vmatprep.subr.mxu0 0.0
    %734 = vmatpush1.msra.mxu0 %v705
    %735 = vmatprep.subr.mxu0 0.0
    %736 = vmatpush1.msra.mxu0 %v706
    %737 = vmatprep.subr.mxu0 0.0
    %738 = vmatpush1.msra.mxu0 %v707
    %739 = vmatprep.subr.mxu0 0.0
    %740 = vmatpush1.msra.mxu0 %v708
    %741 = vmatprep.subr.mxu0 0.0
    %742 = vmatpush1.msra.mxu0 0.0
    %743 = vmatprep.subr.mxu0 0.0
    %744 = vmatpush1.msra.mxu0 0.0
    %745 = vmatprep.subr.mxu0 0.0
    %746 = vmatpush1.msra.mxu0 0.0
    %747 = vmatprep.subr.mxu0 0.0
    %748 = vmatpush1.msra.mxu0 0.0
    %749 = vmatprep.subr.mxu0 0.0
    %750 = vmatpush1.msra.mxu0 0.0
    %751 = vmatprep.subr.mxu0 0.0
    %752 = vmatpush1.msra.mxu0 0.0
    %753 = vmatprep.subr.mxu0 0.0
    %754 = vmatpush1.msra.mxu0 0.0
    %755 = vmatprep.subr.mxu0 0.0
    %756 = vmatpush1.msra.mxu0 0.0
    %757 = vmatprep.subr.mxu0 0.0
    %758 = vmatpush1.msra.mxu0 0.0
    %759 = vmatprep.subr.mxu0 0.0
    %760 = vmatpush1.msra.mxu0 0.0
    %761 = vmatprep.subr.mxu0 0.0
    %762 = vmatpush1.msra.mxu0 0.0
    %763 = vmatprep.subr.mxu0 0.0
    %764 = vmatpush1.msra.mxu0 0.0
    %765 = vmatprep.subr.mxu0 0.0
    %766 = vmatpush1.msra.mxu0 0.0
    %767 = vmatprep.subr.mxu0 0.0
    %768 = vmatpush1.msra.mxu0 0.0
    %769 = vmatprep.subr.mxu0 0.0
    %770 = vmatpush1.msra.mxu0 0.0
    %771 = vmatprep.subr.mxu0 0.0
    %772 = vmatpush1.msra.mxu0 0.0
    %773 = vmatprep.mubr.f32.mxu0 0.0
    %774 = vmatmul.mubr.f32.gmra.mrb[0].mxu0 %v692
    %v775 = vpop.f32.mrb[0].mxu0
    %v776 = vadd.f32 0.0, %v775
    %v777 = vpop.f32.mrb[0].mxu0
    %778 = vdwg.mxu0
    %779 = vst [vmem:[#allocation8] sm:$0xff] %v776
    // Predicated region
    $region26: #{tpu_custom_call.1} parent=1 // pred_check
      _
    $region27: #{tpu_custom_call.1} parent=1 // pred_check_branch
      %781 = sbr.rel (0) target = $region29
    $region28: #{tpu_custom_call.1} parent=1 // pred_region
      %s783 = ssub.s32 128, 128
      %784 = vsyncadd [#allocation4], %s783
      %s786 = sshll.u32 [#allocation8], 4
      %s787 = int_to_ptr.vmem [resolvable:$true] %s786
      %789 = dma.vmem_to_hbm [thread:$0]  %s787, 128, %s3, [#allocation4]
    $region29: #{tpu_custom_call.1} parent=1 // pred_fallthru
      _
    // Predicated region
    $region30: #{tpu_custom_call.1} parent=1 // pred_check
      _
    $region31: #{tpu_custom_call.1} parent=1 // pred_check_branch
      %791 = sbr.rel (0) target = $region33
    $region32: #{tpu_custom_call.1} parent=1 // pred_region
      %792 = dma.done [#allocation4], 128
    $region33: #{tpu_custom_call.1} parent=1 // pred_fallthru
      _
    %793 = vsyncpa [#allocation3], 1
    %794 = vsyncpa [#allocation6], 1
    %795 = vsyncpa [#allocation4], 1

</llo_original>
